<compile_context>
chip_gen: v5e
topology: v5e:2x2
jax: 0.10.0
libtpu: 0.0.40
codegen_flags: <defaults>
</compile_context>

<pallas_src>
import functools

import jax
import jax.numpy as jnp
from jax import lax
from jax.experimental import pallas as pl
from jax.experimental.pallas import tpu as pltpu


def _fused_conv_tanh_conv_kernel(w1_ref, b1_ref, w2_ref, b2_ref, x_ref, o_ref,
                                 *, cin, cmid, cout):
    # x_ref: (cin*16, tr, Lc) input planes; plane p = ci*16 + dh*4 + dw with
    #        (dh, dw) the offset inside the 4x4 input block of each output pos.
    # o_ref: (cout, tr, Lc)
    # w*_ref / b*_ref: flat f32 arrays in SMEM (scalar reads only).
    out_acc = [None] * cout
    for co1 in range(cmid):            # conv1 output channel
        for i in range(2):             # conv1 output row inside the 4x4 block
            for j in range(2):         # conv1 output col inside the 4x4 block
                acc = None
                for ci in range(cin):
                    for kh in range(2):
                        for kw in range(2):
                            p = ci * 16 + (2 * i + kh) * 4 + (2 * j + kw)
                            w = w1_ref[((co1 * cin + ci) * 2 + kh) * 2 + kw]
                            t = x_ref[p] * w
                            acc = t if acc is None else acc + t
                a = jnp.tanh(acc + b1_ref[co1])        # EUP slot; keep as tanh
                for co2 in range(cout):                # feed conv2 on the fly
                    w = w2_ref[((co2 * cmid + co1) * 2 + i) * 2 + j]
                    t = a * w
                    out_acc[co2] = t if out_acc[co2] is None else out_acc[co2] + t
    for co2 in range(cout):
        o_ref[co2] = (out_acc[co2] + b2_ref[co2]).astype(o_ref.dtype)


def model_tanh_forward(x, params):
    w1, b1, w2, b2 = params["w1"], params["b1"], params["w2"], params["b2"]
    B, C, H, W = x.shape
    cmid, cin = w1.shape[0], w1.shape[1]
    cout = w2.shape[0]
    assert C == cin

    # Output spatial sizes of conv1 and conv2 (kernel 2, stride 2, VALID).
    Ho1, Wo1 = (H - 2) // 2 + 1, (W - 2) // 2 + 1
    H2, W2 = (Ho1 - 2) // 2 + 1, (Wo1 - 2) // 2 + 1
    M = B * H2 * W2                       # flattened final output positions

    # ---- single repack pass (XLA): (B,C,H,W) -> (C*16, M) planes ----------
    # Only the 4*H2 x 4*W2 region of x can influence the final output.
    xc = x[:, :, :4 * H2, :4 * W2]
    xr = xc.reshape(B, C, H2, 4, W2, 4).transpose(1, 3, 5, 0, 2, 4)
    xp = xr.reshape(C * 16, M)            # plane index = ci*16 + dh*4 + dw

    # Lane-dense 3-D layout: (planes, Mr, Lc) with Lc a multiple of 128 and
    # 8-row sublane tiles.  ~1 MiB input block per grid step.
    Lc = min(1024, ((M + 127) // 128) * 128)
    tr = 8
    Mr = ((-(-M // Lc)) + tr - 1) // tr * tr
    Mp = Mr * Lc
    xp = jnp.pad(xp, ((0, 0), (0, Mp - M)))
    xp3 = xp.reshape(C * 16, Mr, Lc)

    kern = functools.partial(_fused_conv_tanh_conv_kernel,
                             cin=cin, cmid=cmid, cout=cout)
    smem_spec = pl.BlockSpec(memory_space=pltpu.MemorySpace.SMEM)
    out3 = pl.pallas_call(
        kern,
        out_shape=jax.ShapeDtypeStruct((cout, Mr, Lc), x.dtype),
        grid_spec=pltpu.PrefetchScalarGridSpec(
            num_scalar_prefetch=0,
            grid=(Mr // tr,),
            in_specs=[
                smem_spec,                                   # w1 flat (cmid*cin*4,)
                smem_spec,                                   # b1 (cmid,)
                smem_spec,                                   # w2 flat (cout*cmid*4,)
                smem_spec,                                   # b2 (cout,)
                pl.BlockSpec((C * 16, tr, Lc), lambda i: (0, i, 0)),
            ],
            out_specs=pl.BlockSpec((cout, tr, Lc), lambda i: (0, i, 0)),
        ),
        compiler_params=pltpu.CompilerParams(
            dimension_semantics=("parallel",)),
    )(w1.reshape(-1), b1.reshape(-1), w2.reshape(-1), b2.reshape(-1), xp3)

    # ---- unpack (small: Cout*M elements) and restore NCHW ------------------
    out = out3.reshape(cout, Mp)[:, :M].reshape(cout, B, H2, W2)
    out = out.transpose(1, 0, 2, 3)
    # torch .squeeze(3): removes dim 3 only if it has size 1 (no-op otherwise).
    if out.shape[3] == 1:
        out = jnp.squeeze(out, axis=3)
    return out


def init_params(key):
    # Deterministic init mimicking PyTorch Conv2d uniform(-1/sqrt(fan_in), ...)
    k1, k2, k3, k4 = jax.random.split(key, 4)
    fan_in = 2 * 2 * 2
    bound = 1.0 / (fan_in ** 0.5)
    w1 = jax.random.uniform(k1, (2, 2, 2, 2), jnp.float32, -bound, bound)
    b1 = jax.random.uniform(k2, (2,), jnp.float32, -bound, bound)
    w2 = jax.random.uniform(k3, (2, 2, 2, 2), jnp.float32, -bound, bound)
    b2 = jax.random.uniform(k4, (2,), jnp.float32, -bound, bound)
    return {"w1": w1, "b1": b1, "w2": w2, "b2": b2}


def _reference(x, params):
    def conv(x, w, b):
        y = lax.conv_general_dilated(
            x, w, window_strides=(2, 2), padding="VALID",
            dimension_numbers=("NCHW", "OIHW", "NCHW"))
        return y + b.reshape(1, -1, 1, 1)
    v3 = jnp.tanh(conv(x, params["w1"], params["b1"]))
    out = conv(v3, params["w2"], params["b2"])
    if out.shape[3] == 1:
        out = jnp.squeeze(out, axis=3)
    return out


if __name__ == "__main__":
    key = jax.random.PRNGKey(0)
    kx, kp = jax.random.split(key)
    # Small shapes consistent with the module (original: 128, 2, 77, 87).
    # Odd spatial dims exercise the same edge-row/col truncation.
    x = jax.random.normal(kx, (2, 2, 17, 19), jnp.float32)
    params = init_params(kp)

    fwd = jax.jit(model_tanh_forward)
    out = jax.block_until_ready(fwd(x, params))
    ref = jax.block_until_ready(_reference(x, params))

    assert out.shape == (2, 2, 4, 4), out.shape
    assert out.shape == ref.shape, (out.shape, ref.shape)
    assert jnp.allclose(out, ref, atol=1e-5, rtol=1e-5)
    print("KERNEL_OK")
</pallas_src>

<mosaic_0001>
module attributes {stable_mosaic.version = 11 : i64} {
  func.func @_fused_conv_tanh_conv_kernel(%arg0: i32, %arg1: memref<16xf32, #tpu.memory_space<smem>>, %arg2: memref<2xf32, #tpu.memory_space<smem>>, %arg3: memref<16xf32, #tpu.memory_space<smem>>, %arg4: memref<2xf32, #tpu.memory_space<smem>>, %arg5: memref<32x8x128xf32, #tpu.memory_space<vmem>>, %arg6: memref<2x8x128xf32, #tpu.memory_space<vmem>>) attributes {dimension_semantics = [#tpu.dimension_semantics<parallel>], iteration_bounds = array<i64: 1>, scalar_prefetch = 0 : i64, scratch_operands = 0 : i64, tpu.core_type = #tpu.core_type<tc>, window_params = [{transform_indices = @transform_0, window_bounds = array<i64: 16>}, {transform_indices = @transform_1, window_bounds = array<i64: 2>}, {transform_indices = @transform_2, window_bounds = array<i64: 16>}, {transform_indices = @transform_3, window_bounds = array<i64: 2>}, {transform_indices = @transform_4, window_bounds = array<i64: 32, 8, 128>}, {transform_indices = @transform_5, window_bounds = array<i64: 2, 8, 128>}]} {
    %c0 = arith.constant 0 : index
    %0 = memref.load %arg1[%c0] : memref<16xf32, #tpu.memory_space<smem>>
    %c0_0 = arith.constant 0 : index
    %c0_1 = arith.constant 0 : index
    %c0_2 = arith.constant 0 : index
    %1 = vector.load %arg5[%c0_0, %c0_1, %c0_2] : memref<32x8x128xf32, #tpu.memory_space<vmem>>, vector<1x8x128xf32>
    %2 = vector.shape_cast %1 : vector<1x8x128xf32> to vector<8x128xf32>
    %3 = vector.broadcast %0 : f32 to vector<8x128xf32>
    %4 = arith.mulf %2, %3 : vector<8x128xf32>
    %c1 = arith.constant 1 : index
    %5 = memref.load %arg1[%c1] : memref<16xf32, #tpu.memory_space<smem>>
    %c1_3 = arith.constant 1 : index
    %c0_4 = arith.constant 0 : index
    %c0_5 = arith.constant 0 : index
    %6 = vector.load %arg5[%c1_3, %c0_4, %c0_5] : memref<32x8x128xf32, #tpu.memory_space<vmem>>, vector<1x8x128xf32>
    %7 = vector.shape_cast %6 : vector<1x8x128xf32> to vector<8x128xf32>
    %8 = vector.broadcast %5 : f32 to vector<8x128xf32>
    %9 = arith.mulf %7, %8 : vector<8x128xf32>
    %10 = arith.addf %4, %9 : vector<8x128xf32>
    %c2 = arith.constant 2 : index
    %11 = memref.load %arg1[%c2] : memref<16xf32, #tpu.memory_space<smem>>
    %c4 = arith.constant 4 : index
    %c0_6 = arith.constant 0 : index
    %c0_7 = arith.constant 0 : index
    %12 = vector.load %arg5[%c4, %c0_6, %c0_7] : memref<32x8x128xf32, #tpu.memory_space<vmem>>, vector<1x8x128xf32>
    %13 = vector.shape_cast %12 : vector<1x8x128xf32> to vector<8x128xf32>
    %14 = vector.broadcast %11 : f32 to vector<8x128xf32>
    %15 = arith.mulf %13, %14 : vector<8x128xf32>
    %16 = arith.addf %10, %15 : vector<8x128xf32>
    %c3 = arith.constant 3 : index
    %17 = memref.load %arg1[%c3] : memref<16xf32, #tpu.memory_space<smem>>
    %c5 = arith.constant 5 : index
    %c0_8 = arith.constant 0 : index
    %c0_9 = arith.constant 0 : index
    %18 = vector.load %arg5[%c5, %c0_8, %c0_9] : memref<32x8x128xf32, #tpu.memory_space<vmem>>, vector<1x8x128xf32>
    %19 = vector.shape_cast %18 : vector<1x8x128xf32> to vector<8x128xf32>
    %20 = vector.broadcast %17 : f32 to vector<8x128xf32>
    %21 = arith.mulf %19, %20 : vector<8x128xf32>
    %22 = arith.addf %16, %21 : vector<8x128xf32>
    %c4_10 = arith.constant 4 : index
    %23 = memref.load %arg1[%c4_10] : memref<16xf32, #tpu.memory_space<smem>>
    %c16 = arith.constant 16 : index
    %c0_11 = arith.constant 0 : index
    %c0_12 = arith.constant 0 : index
    %24 = vector.load %arg5[%c16, %c0_11, %c0_12] : memref<32x8x128xf32, #tpu.memory_space<vmem>>, vector<1x8x128xf32>
    %25 = vector.shape_cast %24 : vector<1x8x128xf32> to vector<8x128xf32>
    %26 = vector.broadcast %23 : f32 to vector<8x128xf32>
    %27 = arith.mulf %25, %26 : vector<8x128xf32>
    %28 = arith.addf %22, %27 : vector<8x128xf32>
    %c5_13 = arith.constant 5 : index
    %29 = memref.load %arg1[%c5_13] : memref<16xf32, #tpu.memory_space<smem>>
    %c17 = arith.constant 17 : index
    %c0_14 = arith.constant 0 : index
    %c0_15 = arith.constant 0 : index
    %30 = vector.load %arg5[%c17, %c0_14, %c0_15] : memref<32x8x128xf32, #tpu.memory_space<vmem>>, vector<1x8x128xf32>
    %31 = vector.shape_cast %30 : vector<1x8x128xf32> to vector<8x128xf32>
    %32 = vector.broadcast %29 : f32 to vector<8x128xf32>
    %33 = arith.mulf %31, %32 : vector<8x128xf32>
    %34 = arith.addf %28, %33 : vector<8x128xf32>
    %c6 = arith.constant 6 : index
    %35 = memref.load %arg1[%c6] : memref<16xf32, #tpu.memory_space<smem>>
    %c20 = arith.constant 20 : index
    %c0_16 = arith.constant 0 : index
    %c0_17 = arith.constant 0 : index
    %36 = vector.load %arg5[%c20, %c0_16, %c0_17] : memref<32x8x128xf32, #tpu.memory_space<vmem>>, vector<1x8x128xf32>
    %37 = vector.shape_cast %36 : vector<1x8x128xf32> to vector<8x128xf32>
    %38 = vector.broadcast %35 : f32 to vector<8x128xf32>
    %39 = arith.mulf %37, %38 : vector<8x128xf32>
    %40 = arith.addf %34, %39 : vector<8x128xf32>
    %c7 = arith.constant 7 : index
    %41 = memref.load %arg1[%c7] : memref<16xf32, #tpu.memory_space<smem>>
    %c21 = arith.constant 21 : index
    %c0_18 = arith.constant 0 : index
    %c0_19 = arith.constant 0 : index
    %42 = vector.load %arg5[%c21, %c0_18, %c0_19] : memref<32x8x128xf32, #tpu.memory_space<vmem>>, vector<1x8x128xf32>
    %43 = vector.shape_cast %42 : vector<1x8x128xf32> to vector<8x128xf32>
    %44 = vector.broadcast %41 : f32 to vector<8x128xf32>
    %45 = arith.mulf %43, %44 : vector<8x128xf32>
    %46 = arith.addf %40, %45 : vector<8x128xf32>
    %c0_20 = arith.constant 0 : index
    %47 = memref.load %arg2[%c0_20] : memref<2xf32, #tpu.memory_space<smem>>
    %48 = vector.broadcast %47 : f32 to vector<8x128xf32>
    %49 = arith.addf %46, %48 : vector<8x128xf32>
    %50 = math.tanh %49 : vector<8x128xf32>
    %c0_21 = arith.constant 0 : index
    %51 = memref.load %arg3[%c0_21] : memref<16xf32, #tpu.memory_space<smem>>
    %52 = vector.broadcast %51 : f32 to vector<8x128xf32>
    %53 = arith.mulf %50, %52 : vector<8x128xf32>
    %c8 = arith.constant 8 : index
    %54 = memref.load %arg3[%c8] : memref<16xf32, #tpu.memory_space<smem>>
    %55 = vector.broadcast %54 : f32 to vector<8x128xf32>
    %56 = arith.mulf %50, %55 : vector<8x128xf32>
    %c0_22 = arith.constant 0 : index
    %57 = memref.load %arg1[%c0_22] : memref<16xf32, #tpu.memory_space<smem>>
    %c2_23 = arith.constant 2 : index
    %c0_24 = arith.constant 0 : index
    %c0_25 = arith.constant 0 : index
    %58 = vector.load %arg5[%c2_23, %c0_24, %c0_25] : memref<32x8x128xf32, #tpu.memory_space<vmem>>, vector<1x8x128xf32>
    %59 = vector.shape_cast %58 : vector<1x8x128xf32> to vector<8x128xf32>
    %60 = vector.broadcast %57 : f32 to vector<8x128xf32>
    %61 = arith.mulf %59, %60 : vector<8x128xf32>
    %c1_26 = arith.constant 1 : index
    %62 = memref.load %arg1[%c1_26] : memref<16xf32, #tpu.memory_space<smem>>
    %c3_27 = arith.constant 3 : index
    %c0_28 = arith.constant 0 : index
    %c0_29 = arith.constant 0 : index
    %63 = vector.load %arg5[%c3_27, %c0_28, %c0_29] : memref<32x8x128xf32, #tpu.memory_space<vmem>>, vector<1x8x128xf32>
    %64 = vector.shape_cast %63 : vector<1x8x128xf32> to vector<8x128xf32>
    %65 = vector.broadcast %62 : f32 to vector<8x128xf32>
    %66 = arith.mulf %64, %65 : vector<8x128xf32>
    %67 = arith.addf %61, %66 : vector<8x128xf32>
    %c2_30 = arith.constant 2 : index
    %68 = memref.load %arg1[%c2_30] : memref<16xf32, #tpu.memory_space<smem>>
    %c6_31 = arith.constant 6 : index
    %c0_32 = arith.constant 0 : index
    %c0_33 = arith.constant 0 : index
    %69 = vector.load %arg5[%c6_31, %c0_32, %c0_33] : memref<32x8x128xf32, #tpu.memory_space<vmem>>, vector<1x8x128xf32>
    %70 = vector.shape_cast %69 : vector<1x8x128xf32> to vector<8x128xf32>
    %71 = vector.broadcast %68 : f32 to vector<8x128xf32>
    %72 = arith.mulf %70, %71 : vector<8x128xf32>
    %73 = arith.addf %67, %72 : vector<8x128xf32>
    %c3_34 = arith.constant 3 : index
    %74 = memref.load %arg1[%c3_34] : memref<16xf32, #tpu.memory_space<smem>>
    %c7_35 = arith.constant 7 : index
    %c0_36 = arith.constant 0 : index
    %c0_37 = arith.constant 0 : index
    %75 = vector.load %arg5[%c7_35, %c0_36, %c0_37] : memref<32x8x128xf32, #tpu.memory_space<vmem>>, vector<1x8x128xf32>
    %76 = vector.shape_cast %75 : vector<1x8x128xf32> to vector<8x128xf32>
    %77 = vector.broadcast %74 : f32 to vector<8x128xf32>
    %78 = arith.mulf %76, %77 : vector<8x128xf32>
    %79 = arith.addf %73, %78 : vector<8x128xf32>
    %c4_38 = arith.constant 4 : index
    %80 = memref.load %arg1[%c4_38] : memref<16xf32, #tpu.memory_space<smem>>
    %c18 = arith.constant 18 : index
    %c0_39 = arith.constant 0 : index
    %c0_40 = arith.constant 0 : index
    %81 = vector.load %arg5[%c18, %c0_39, %c0_40] : memref<32x8x128xf32, #tpu.memory_space<vmem>>, vector<1x8x128xf32>
    %82 = vector.shape_cast %81 : vector<1x8x128xf32> to vector<8x128xf32>
    %83 = vector.broadcast %80 : f32 to vector<8x128xf32>
    %84 = arith.mulf %82, %83 : vector<8x128xf32>
    %85 = arith.addf %79, %84 : vector<8x128xf32>
    %c5_41 = arith.constant 5 : index
    %86 = memref.load %arg1[%c5_41] : memref<16xf32, #tpu.memory_space<smem>>
    %c19 = arith.constant 19 : index
    %c0_42 = arith.constant 0 : index
    %c0_43 = arith.constant 0 : index
    %87 = vector.load %arg5[%c19, %c0_42, %c0_43] : memref<32x8x128xf32, #tpu.memory_space<vmem>>, vector<1x8x128xf32>
    %88 = vector.shape_cast %87 : vector<1x8x128xf32> to vector<8x128xf32>
    %89 = vector.broadcast %86 : f32 to vector<8x128xf32>
    %90 = arith.mulf %88, %89 : vector<8x128xf32>
    %91 = arith.addf %85, %90 : vector<8x128xf32>
    %c6_44 = arith.constant 6 : index
    %92 = memref.load %arg1[%c6_44] : memref<16xf32, #tpu.memory_space<smem>>
    %c22 = arith.constant 22 : index
    %c0_45 = arith.constant 0 : index
    %c0_46 = arith.constant 0 : index
    %93 = vector.load %arg5[%c22, %c0_45, %c0_46] : memref<32x8x128xf32, #tpu.memory_space<vmem>>, vector<1x8x128xf32>
    %94 = vector.shape_cast %93 : vector<1x8x128xf32> to vector<8x128xf32>
    %95 = vector.broadcast %92 : f32 to vector<8x128xf32>
    %96 = arith.mulf %94, %95 : vector<8x128xf32>
    %97 = arith.addf %91, %96 : vector<8x128xf32>
    %c7_47 = arith.constant 7 : index
    %98 = memref.load %arg1[%c7_47] : memref<16xf32, #tpu.memory_space<smem>>
    %c23 = arith.constant 23 : index
    %c0_48 = arith.constant 0 : index
    %c0_49 = arith.constant 0 : index
    %99 = vector.load %arg5[%c23, %c0_48, %c0_49] : memref<32x8x128xf32, #tpu.memory_space<vmem>>, vector<1x8x128xf32>
    %100 = vector.shape_cast %99 : vector<1x8x128xf32> to vector<8x128xf32>
    %101 = vector.broadcast %98 : f32 to vector<8x128xf32>
    %102 = arith.mulf %100, %101 : vector<8x128xf32>
    %103 = arith.addf %97, %102 : vector<8x128xf32>
    %c0_50 = arith.constant 0 : index
    %104 = memref.load %arg2[%c0_50] : memref<2xf32, #tpu.memory_space<smem>>
    %105 = vector.broadcast %104 : f32 to vector<8x128xf32>
    %106 = arith.addf %103, %105 : vector<8x128xf32>
    %107 = math.tanh %106 : vector<8x128xf32>
    %c1_51 = arith.constant 1 : index
    %108 = memref.load %arg3[%c1_51] : memref<16xf32, #tpu.memory_space<smem>>
    %109 = vector.broadcast %108 : f32 to vector<8x128xf32>
    %110 = arith.mulf %107, %109 : vector<8x128xf32>
    %111 = arith.addf %53, %110 : vector<8x128xf32>
    %c9 = arith.constant 9 : index
    %112 = memref.load %arg3[%c9] : memref<16xf32, #tpu.memory_space<smem>>
    %113 = vector.broadcast %112 : f32 to vector<8x128xf32>
    %114 = arith.mulf %107, %113 : vector<8x128xf32>
    %115 = arith.addf %56, %114 : vector<8x128xf32>
    %c0_52 = arith.constant 0 : index
    %116 = memref.load %arg1[%c0_52] : memref<16xf32, #tpu.memory_space<smem>>
    %c8_53 = arith.constant 8 : index
    %c0_54 = arith.constant 0 : index
    %c0_55 = arith.constant 0 : index
    %117 = vector.load %arg5[%c8_53, %c0_54, %c0_55] : memref<32x8x128xf32, #tpu.memory_space<vmem>>, vector<1x8x128xf32>
    %118 = vector.shape_cast %117 : vector<1x8x128xf32> to vector<8x128xf32>
    %119 = vector.broadcast %116 : f32 to vector<8x128xf32>
    %120 = arith.mulf %118, %119 : vector<8x128xf32>
    %c1_56 = arith.constant 1 : index
    %121 = memref.load %arg1[%c1_56] : memref<16xf32, #tpu.memory_space<smem>>
    %c9_57 = arith.constant 9 : index
    %c0_58 = arith.constant 0 : index
    %c0_59 = arith.constant 0 : index
    %122 = vector.load %arg5[%c9_57, %c0_58, %c0_59] : memref<32x8x128xf32, #tpu.memory_space<vmem>>, vector<1x8x128xf32>
    %123 = vector.shape_cast %122 : vector<1x8x128xf32> to vector<8x128xf32>
    %124 = vector.broadcast %121 : f32 to vector<8x128xf32>
    %125 = arith.mulf %123, %124 : vector<8x128xf32>
    %126 = arith.addf %120, %125 : vector<8x128xf32>
    %c2_60 = arith.constant 2 : index
    %127 = memref.load %arg1[%c2_60] : memref<16xf32, #tpu.memory_space<smem>>
    %c12 = arith.constant 12 : index
    %c0_61 = arith.constant 0 : index
    %c0_62 = arith.constant 0 : index
    %128 = vector.load %arg5[%c12, %c0_61, %c0_62] : memref<32x8x128xf32, #tpu.memory_space<vmem>>, vector<1x8x128xf32>
    %129 = vector.shape_cast %128 : vector<1x8x128xf32> to vector<8x128xf32>
    %130 = vector.broadcast %127 : f32 to vector<8x128xf32>
    %131 = arith.mulf %129, %130 : vector<8x128xf32>
    %132 = arith.addf %126, %131 : vector<8x128xf32>
    %c3_63 = arith.constant 3 : index
    %133 = memref.load %arg1[%c3_63] : memref<16xf32, #tpu.memory_space<smem>>
    %c13 = arith.constant 13 : index
    %c0_64 = arith.constant 0 : index
    %c0_65 = arith.constant 0 : index
    %134 = vector.load %arg5[%c13, %c0_64, %c0_65] : memref<32x8x128xf32, #tpu.memory_space<vmem>>, vector<1x8x128xf32>
    %135 = vector.shape_cast %134 : vector<1x8x128xf32> to vector<8x128xf32>
    %136 = vector.broadcast %133 : f32 to vector<8x128xf32>
    %137 = arith.mulf %135, %136 : vector<8x128xf32>
    %138 = arith.addf %132, %137 : vector<8x128xf32>
    %c4_66 = arith.constant 4 : index
    %139 = memref.load %arg1[%c4_66] : memref<16xf32, #tpu.memory_space<smem>>
    %c24 = arith.constant 24 : index
    %c0_67 = arith.constant 0 : index
    %c0_68 = arith.constant 0 : index
    %140 = vector.load %arg5[%c24, %c0_67, %c0_68] : memref<32x8x128xf32, #tpu.memory_space<vmem>>, vector<1x8x128xf32>
    %141 = vector.shape_cast %140 : vector<1x8x128xf32> to vector<8x128xf32>
    %142 = vector.broadcast %139 : f32 to vector<8x128xf32>
    %143 = arith.mulf %141, %142 : vector<8x128xf32>
    %144 = arith.addf %138, %143 : vector<8x128xf32>
    %c5_69 = arith.constant 5 : index
    %145 = memref.load %arg1[%c5_69] : memref<16xf32, #tpu.memory_space<smem>>
    %c25 = arith.constant 25 : index
    %c0_70 = arith.constant 0 : index
    %c0_71 = arith.constant 0 : index
    %146 = vector.load %arg5[%c25, %c0_70, %c0_71] : memref<32x8x128xf32, #tpu.memory_space<vmem>>, vector<1x8x128xf32>
    %147 = vector.shape_cast %146 : vector<1x8x128xf32> to vector<8x128xf32>
    %148 = vector.broadcast %145 : f32 to vector<8x128xf32>
    %149 = arith.mulf %147, %148 : vector<8x128xf32>
    %150 = arith.addf %144, %149 : vector<8x128xf32>
    %c6_72 = arith.constant 6 : index
    %151 = memref.load %arg1[%c6_72] : memref<16xf32, #tpu.memory_space<smem>>
    %c28 = arith.constant 28 : index
    %c0_73 = arith.constant 0 : index
    %c0_74 = arith.constant 0 : index
    %152 = vector.load %arg5[%c28, %c0_73, %c0_74] : memref<32x8x128xf32, #tpu.memory_space<vmem>>, vector<1x8x128xf32>
    %153 = vector.shape_cast %152 : vector<1x8x128xf32> to vector<8x128xf32>
    %154 = vector.broadcast %151 : f32 to vector<8x128xf32>
    %155 = arith.mulf %153, %154 : vector<8x128xf32>
    %156 = arith.addf %150, %155 : vector<8x128xf32>
    %c7_75 = arith.constant 7 : index
    %157 = memref.load %arg1[%c7_75] : memref<16xf32, #tpu.memory_space<smem>>
    %c29 = arith.constant 29 : index
    %c0_76 = arith.constant 0 : index
    %c0_77 = arith.constant 0 : index
    %158 = vector.load %arg5[%c29, %c0_76, %c0_77] : memref<32x8x128xf32, #tpu.memory_space<vmem>>, vector<1x8x128xf32>
    %159 = vector.shape_cast %158 : vector<1x8x128xf32> to vector<8x128xf32>
    %160 = vector.broadcast %157 : f32 to vector<8x128xf32>
    %161 = arith.mulf %159, %160 : vector<8x128xf32>
    %162 = arith.addf %156, %161 : vector<8x128xf32>
    %c0_78 = arith.constant 0 : index
    %163 = memref.load %arg2[%c0_78] : memref<2xf32, #tpu.memory_space<smem>>
    %164 = vector.broadcast %163 : f32 to vector<8x128xf32>
    %165 = arith.addf %162, %164 : vector<8x128xf32>
    %166 = math.tanh %165 : vector<8x128xf32>
    %c2_79 = arith.constant 2 : index
    %167 = memref.load %arg3[%c2_79] : memref<16xf32, #tpu.memory_space<smem>>
    %168 = vector.broadcast %167 : f32 to vector<8x128xf32>
    %169 = arith.mulf %166, %168 : vector<8x128xf32>
    %170 = arith.addf %111, %169 : vector<8x128xf32>
    %c10 = arith.constant 10 : index
    %171 = memref.load %arg3[%c10] : memref<16xf32, #tpu.memory_space<smem>>
    %172 = vector.broadcast %171 : f32 to vector<8x128xf32>
    %173 = arith.mulf %166, %172 : vector<8x128xf32>
    %174 = arith.addf %115, %173 : vector<8x128xf32>
    %c0_80 = arith.constant 0 : index
    %175 = memref.load %arg1[%c0_80] : memref<16xf32, #tpu.memory_space<smem>>
    %c10_81 = arith.constant 10 : index
    %c0_82 = arith.constant 0 : index
    %c0_83 = arith.constant 0 : index
    %176 = vector.load %arg5[%c10_81, %c0_82, %c0_83] : memref<32x8x128xf32, #tpu.memory_space<vmem>>, vector<1x8x128xf32>
    %177 = vector.shape_cast %176 : vector<1x8x128xf32> to vector<8x128xf32>
    %178 = vector.broadcast %175 : f32 to vector<8x128xf32>
    %179 = arith.mulf %177, %178 : vector<8x128xf32>
    %c1_84 = arith.constant 1 : index
    %180 = memref.load %arg1[%c1_84] : memref<16xf32, #tpu.memory_space<smem>>
    %c11 = arith.constant 11 : index
    %c0_85 = arith.constant 0 : index
    %c0_86 = arith.constant 0 : index
    %181 = vector.load %arg5[%c11, %c0_85, %c0_86] : memref<32x8x128xf32, #tpu.memory_space<vmem>>, vector<1x8x128xf32>
    %182 = vector.shape_cast %181 : vector<1x8x128xf32> to vector<8x128xf32>
    %183 = vector.broadcast %180 : f32 to vector<8x128xf32>
    %184 = arith.mulf %182, %183 : vector<8x128xf32>
    %185 = arith.addf %179, %184 : vector<8x128xf32>
    %c2_87 = arith.constant 2 : index
    %186 = memref.load %arg1[%c2_87] : memref<16xf32, #tpu.memory_space<smem>>
    %c14 = arith.constant 14 : index
    %c0_88 = arith.constant 0 : index
    %c0_89 = arith.constant 0 : index
    %187 = vector.load %arg5[%c14, %c0_88, %c0_89] : memref<32x8x128xf32, #tpu.memory_space<vmem>>, vector<1x8x128xf32>
    %188 = vector.shape_cast %187 : vector<1x8x128xf32> to vector<8x128xf32>
    %189 = vector.broadcast %186 : f32 to vector<8x128xf32>
    %190 = arith.mulf %188, %189 : vector<8x128xf32>
    %191 = arith.addf %185, %190 : vector<8x128xf32>
    %c3_90 = arith.constant 3 : index
    %192 = memref.load %arg1[%c3_90] : memref<16xf32, #tpu.memory_space<smem>>
    %c15 = arith.constant 15 : index
    %c0_91 = arith.constant 0 : index
    %c0_92 = arith.constant 0 : index
    %193 = vector.load %arg5[%c15, %c0_91, %c0_92] : memref<32x8x128xf32, #tpu.memory_space<vmem>>, vector<1x8x128xf32>
    %194 = vector.shape_cast %193 : vector<1x8x128xf32> to vector<8x128xf32>
    %195 = vector.broadcast %192 : f32 to vector<8x128xf32>
    %196 = arith.mulf %194, %195 : vector<8x128xf32>
    %197 = arith.addf %191, %196 : vector<8x128xf32>
    %c4_93 = arith.constant 4 : index
    %198 = memref.load %arg1[%c4_93] : memref<16xf32, #tpu.memory_space<smem>>
    %c26 = arith.constant 26 : index
    %c0_94 = arith.constant 0 : index
    %c0_95 = arith.constant 0 : index
    %199 = vector.load %arg5[%c26, %c0_94, %c0_95] : memref<32x8x128xf32, #tpu.memory_space<vmem>>, vector<1x8x128xf32>
    %200 = vector.shape_cast %199 : vector<1x8x128xf32> to vector<8x128xf32>
    %201 = vector.broadcast %198 : f32 to vector<8x128xf32>
    %202 = arith.mulf %200, %201 : vector<8x128xf32>
    %203 = arith.addf %197, %202 : vector<8x128xf32>
    %c5_96 = arith.constant 5 : index
    %204 = memref.load %arg1[%c5_96] : memref<16xf32, #tpu.memory_space<smem>>
    %c27 = arith.constant 27 : index
    %c0_97 = arith.constant 0 : index
    %c0_98 = arith.constant 0 : index
    %205 = vector.load %arg5[%c27, %c0_97, %c0_98] : memref<32x8x128xf32, #tpu.memory_space<vmem>>, vector<1x8x128xf32>
    %206 = vector.shape_cast %205 : vector<1x8x128xf32> to vector<8x128xf32>
    %207 = vector.broadcast %204 : f32 to vector<8x128xf32>
    %208 = arith.mulf %206, %207 : vector<8x128xf32>
    %209 = arith.addf %203, %208 : vector<8x128xf32>
    %c6_99 = arith.constant 6 : index
    %210 = memref.load %arg1[%c6_99] : memref<16xf32, #tpu.memory_space<smem>>
    %c30 = arith.constant 30 : index
    %c0_100 = arith.constant 0 : index
    %c0_101 = arith.constant 0 : index
    %211 = vector.load %arg5[%c30, %c0_100, %c0_101] : memref<32x8x128xf32, #tpu.memory_space<vmem>>, vector<1x8x128xf32>
    %212 = vector.shape_cast %211 : vector<1x8x128xf32> to vector<8x128xf32>
    %213 = vector.broadcast %210 : f32 to vector<8x128xf32>
    %214 = arith.mulf %212, %213 : vector<8x128xf32>
    %215 = arith.addf %209, %214 : vector<8x128xf32>
    %c7_102 = arith.constant 7 : index
    %216 = memref.load %arg1[%c7_102] : memref<16xf32, #tpu.memory_space<smem>>
    %c31 = arith.constant 31 : index
    %c0_103 = arith.constant 0 : index
    %c0_104 = arith.constant 0 : index
    %217 = vector.load %arg5[%c31, %c0_103, %c0_104] : memref<32x8x128xf32, #tpu.memory_space<vmem>>, vector<1x8x128xf32>
    %218 = vector.shape_cast %217 : vector<1x8x128xf32> to vector<8x128xf32>
    %219 = vector.broadcast %216 : f32 to vector<8x128xf32>
    %220 = arith.mulf %218, %219 : vector<8x128xf32>
    %221 = arith.addf %215, %220 : vector<8x128xf32>
    %c0_105 = arith.constant 0 : index
    %222 = memref.load %arg2[%c0_105] : memref<2xf32, #tpu.memory_space<smem>>
    %223 = vector.broadcast %222 : f32 to vector<8x128xf32>
    %224 = arith.addf %221, %223 : vector<8x128xf32>
    %225 = math.tanh %224 : vector<8x128xf32>
    %c3_106 = arith.constant 3 : index
    %226 = memref.load %arg3[%c3_106] : memref<16xf32, #tpu.memory_space<smem>>
    %227 = vector.broadcast %226 : f32 to vector<8x128xf32>
    %228 = arith.mulf %225, %227 : vector<8x128xf32>
    %229 = arith.addf %170, %228 : vector<8x128xf32>
    %c11_107 = arith.constant 11 : index
    %230 = memref.load %arg3[%c11_107] : memref<16xf32, #tpu.memory_space<smem>>
    %231 = vector.broadcast %230 : f32 to vector<8x128xf32>
    %232 = arith.mulf %225, %231 : vector<8x128xf32>
    %233 = arith.addf %174, %232 : vector<8x128xf32>
    %c8_108 = arith.constant 8 : index
    %234 = memref.load %arg1[%c8_108] : memref<16xf32, #tpu.memory_space<smem>>
    %c0_109 = arith.constant 0 : index
    %c0_110 = arith.constant 0 : index
    %c0_111 = arith.constant 0 : index
    %235 = vector.load %arg5[%c0_109, %c0_110, %c0_111] : memref<32x8x128xf32, #tpu.memory_space<vmem>>, vector<1x8x128xf32>
    %236 = vector.shape_cast %235 : vector<1x8x128xf32> to vector<8x128xf32>
    %237 = vector.broadcast %234 : f32 to vector<8x128xf32>
    %238 = arith.mulf %236, %237 : vector<8x128xf32>
    %c9_112 = arith.constant 9 : index
    %239 = memref.load %arg1[%c9_112] : memref<16xf32, #tpu.memory_space<smem>>
    %c1_113 = arith.constant 1 : index
    %c0_114 = arith.constant 0 : index
    %c0_115 = arith.constant 0 : index
    %240 = vector.load %arg5[%c1_113, %c0_114, %c0_115] : memref<32x8x128xf32, #tpu.memory_space<vmem>>, vector<1x8x128xf32>
    %241 = vector.shape_cast %240 : vector<1x8x128xf32> to vector<8x128xf32>
    %242 = vector.broadcast %239 : f32 to vector<8x128xf32>
    %243 = arith.mulf %241, %242 : vector<8x128xf32>
    %244 = arith.addf %238, %243 : vector<8x128xf32>
    %c10_116 = arith.constant 10 : index
    %245 = memref.load %arg1[%c10_116] : memref<16xf32, #tpu.memory_space<smem>>
    %c4_117 = arith.constant 4 : index
    %c0_118 = arith.constant 0 : index
    %c0_119 = arith.constant 0 : index
    %246 = vector.load %arg5[%c4_117, %c0_118, %c0_119] : memref<32x8x128xf32, #tpu.memory_space<vmem>>, vector<1x8x128xf32>
    %247 = vector.shape_cast %246 : vector<1x8x128xf32> to vector<8x128xf32>
    %248 = vector.broadcast %245 : f32 to vector<8x128xf32>
    %249 = arith.mulf %247, %248 : vector<8x128xf32>
    %250 = arith.addf %244, %249 : vector<8x128xf32>
    %c11_120 = arith.constant 11 : index
    %251 = memref.load %arg1[%c11_120] : memref<16xf32, #tpu.memory_space<smem>>
    %c5_121 = arith.constant 5 : index
    %c0_122 = arith.constant 0 : index
    %c0_123 = arith.constant 0 : index
    %252 = vector.load %arg5[%c5_121, %c0_122, %c0_123] : memref<32x8x128xf32, #tpu.memory_space<vmem>>, vector<1x8x128xf32>
    %253 = vector.shape_cast %252 : vector<1x8x128xf32> to vector<8x128xf32>
    %254 = vector.broadcast %251 : f32 to vector<8x128xf32>
    %255 = arith.mulf %253, %254 : vector<8x128xf32>
    %256 = arith.addf %250, %255 : vector<8x128xf32>
    %c12_124 = arith.constant 12 : index
    %257 = memref.load %arg1[%c12_124] : memref<16xf32, #tpu.memory_space<smem>>
    %c16_125 = arith.constant 16 : index
    %c0_126 = arith.constant 0 : index
    %c0_127 = arith.constant 0 : index
    %258 = vector.load %arg5[%c16_125, %c0_126, %c0_127] : memref<32x8x128xf32, #tpu.memory_space<vmem>>, vector<1x8x128xf32>
    %259 = vector.shape_cast %258 : vector<1x8x128xf32> to vector<8x128xf32>
    %260 = vector.broadcast %257 : f32 to vector<8x128xf32>
    %261 = arith.mulf %259, %260 : vector<8x128xf32>
    %262 = arith.addf %256, %261 : vector<8x128xf32>
    %c13_128 = arith.constant 13 : index
    %263 = memref.load %arg1[%c13_128] : memref<16xf32, #tpu.memory_space<smem>>
    %c17_129 = arith.constant 17 : index
    %c0_130 = arith.constant 0 : index
    %c0_131 = arith.constant 0 : index
    %264 = vector.load %arg5[%c17_129, %c0_130, %c0_131] : memref<32x8x128xf32, #tpu.memory_space<vmem>>, vector<1x8x128xf32>
    %265 = vector.shape_cast %264 : vector<1x8x128xf32> to vector<8x128xf32>
    %266 = vector.broadcast %263 : f32 to vector<8x128xf32>
    %267 = arith.mulf %265, %266 : vector<8x128xf32>
    %268 = arith.addf %262, %267 : vector<8x128xf32>
    %c14_132 = arith.constant 14 : index
    %269 = memref.load %arg1[%c14_132] : memref<16xf32, #tpu.memory_space<smem>>
    %c20_133 = arith.constant 20 : index
    %c0_134 = arith.constant 0 : index
    %c0_135 = arith.constant 0 : index
    %270 = vector.load %arg5[%c20_133, %c0_134, %c0_135] : memref<32x8x128xf32, #tpu.memory_space<vmem>>, vector<1x8x128xf32>
    %271 = vector.shape_cast %270 : vector<1x8x128xf32> to vector<8x128xf32>
    %272 = vector.broadcast %269 : f32 to vector<8x128xf32>
    %273 = arith.mulf %271, %272 : vector<8x128xf32>
    %274 = arith.addf %268, %273 : vector<8x128xf32>
    %c15_136 = arith.constant 15 : index
    %275 = memref.load %arg1[%c15_136] : memref<16xf32, #tpu.memory_space<smem>>
    %c21_137 = arith.constant 21 : index
    %c0_138 = arith.constant 0 : index
    %c0_139 = arith.constant 0 : index
    %276 = vector.load %arg5[%c21_137, %c0_138, %c0_139] : memref<32x8x128xf32, #tpu.memory_space<vmem>>, vector<1x8x128xf32>
    %277 = vector.shape_cast %276 : vector<1x8x128xf32> to vector<8x128xf32>
    %278 = vector.broadcast %275 : f32 to vector<8x128xf32>
    %279 = arith.mulf %277, %278 : vector<8x128xf32>
    %280 = arith.addf %274, %279 : vector<8x128xf32>
    %c1_140 = arith.constant 1 : index
    %281 = memref.load %arg2[%c1_140] : memref<2xf32, #tpu.memory_space<smem>>
    %282 = vector.broadcast %281 : f32 to vector<8x128xf32>
    %283 = arith.addf %280, %282 : vector<8x128xf32>
    %284 = math.tanh %283 : vector<8x128xf32>
    %c4_141 = arith.constant 4 : index
    %285 = memref.load %arg3[%c4_141] : memref<16xf32, #tpu.memory_space<smem>>
    %286 = vector.broadcast %285 : f32 to vector<8x128xf32>
    %287 = arith.mulf %284, %286 : vector<8x128xf32>
    %288 = arith.addf %229, %287 : vector<8x128xf32>
    %c12_142 = arith.constant 12 : index
    %289 = memref.load %arg3[%c12_142] : memref<16xf32, #tpu.memory_space<smem>>
    %290 = vector.broadcast %289 : f32 to vector<8x128xf32>
    %291 = arith.mulf %284, %290 : vector<8x128xf32>
    %292 = arith.addf %233, %291 : vector<8x128xf32>
    %c8_143 = arith.constant 8 : index
    %293 = memref.load %arg1[%c8_143] : memref<16xf32, #tpu.memory_space<smem>>
    %c2_144 = arith.constant 2 : index
    %c0_145 = arith.constant 0 : index
    %c0_146 = arith.constant 0 : index
    %294 = vector.load %arg5[%c2_144, %c0_145, %c0_146] : memref<32x8x128xf32, #tpu.memory_space<vmem>>, vector<1x8x128xf32>
    %295 = vector.shape_cast %294 : vector<1x8x128xf32> to vector<8x128xf32>
    %296 = vector.broadcast %293 : f32 to vector<8x128xf32>
    %297 = arith.mulf %295, %296 : vector<8x128xf32>
    %c9_147 = arith.constant 9 : index
    %298 = memref.load %arg1[%c9_147] : memref<16xf32, #tpu.memory_space<smem>>
    %c3_148 = arith.constant 3 : index
    %c0_149 = arith.constant 0 : index
    %c0_150 = arith.constant 0 : index
    %299 = vector.load %arg5[%c3_148, %c0_149, %c0_150] : memref<32x8x128xf32, #tpu.memory_space<vmem>>, vector<1x8x128xf32>
    %300 = vector.shape_cast %299 : vector<1x8x128xf32> to vector<8x128xf32>
    %301 = vector.broadcast %298 : f32 to vector<8x128xf32>
    %302 = arith.mulf %300, %301 : vector<8x128xf32>
    %303 = arith.addf %297, %302 : vector<8x128xf32>
    %c10_151 = arith.constant 10 : index
    %304 = memref.load %arg1[%c10_151] : memref<16xf32, #tpu.memory_space<smem>>
    %c6_152 = arith.constant 6 : index
    %c0_153 = arith.constant 0 : index
    %c0_154 = arith.constant 0 : index
    %305 = vector.load %arg5[%c6_152, %c0_153, %c0_154] : memref<32x8x128xf32, #tpu.memory_space<vmem>>, vector<1x8x128xf32>
    %306 = vector.shape_cast %305 : vector<1x8x128xf32> to vector<8x128xf32>
    %307 = vector.broadcast %304 : f32 to vector<8x128xf32>
    %308 = arith.mulf %306, %307 : vector<8x128xf32>
    %309 = arith.addf %303, %308 : vector<8x128xf32>
    %c11_155 = arith.constant 11 : index
    %310 = memref.load %arg1[%c11_155] : memref<16xf32, #tpu.memory_space<smem>>
    %c7_156 = arith.constant 7 : index
    %c0_157 = arith.constant 0 : index
    %c0_158 = arith.constant 0 : index
    %311 = vector.load %arg5[%c7_156, %c0_157, %c0_158] : memref<32x8x128xf32, #tpu.memory_space<vmem>>, vector<1x8x128xf32>
    %312 = vector.shape_cast %311 : vector<1x8x128xf32> to vector<8x128xf32>
    %313 = vector.broadcast %310 : f32 to vector<8x128xf32>
    %314 = arith.mulf %312, %313 : vector<8x128xf32>
    %315 = arith.addf %309, %314 : vector<8x128xf32>
    %c12_159 = arith.constant 12 : index
    %316 = memref.load %arg1[%c12_159] : memref<16xf32, #tpu.memory_space<smem>>
    %c18_160 = arith.constant 18 : index
    %c0_161 = arith.constant 0 : index
    %c0_162 = arith.constant 0 : index
    %317 = vector.load %arg5[%c18_160, %c0_161, %c0_162] : memref<32x8x128xf32, #tpu.memory_space<vmem>>, vector<1x8x128xf32>
    %318 = vector.shape_cast %317 : vector<1x8x128xf32> to vector<8x128xf32>
    %319 = vector.broadcast %316 : f32 to vector<8x128xf32>
    %320 = arith.mulf %318, %319 : vector<8x128xf32>
    %321 = arith.addf %315, %320 : vector<8x128xf32>
    %c13_163 = arith.constant 13 : index
    %322 = memref.load %arg1[%c13_163] : memref<16xf32, #tpu.memory_space<smem>>
    %c19_164 = arith.constant 19 : index
    %c0_165 = arith.constant 0 : index
    %c0_166 = arith.constant 0 : index
    %323 = vector.load %arg5[%c19_164, %c0_165, %c0_166] : memref<32x8x128xf32, #tpu.memory_space<vmem>>, vector<1x8x128xf32>
    %324 = vector.shape_cast %323 : vector<1x8x128xf32> to vector<8x128xf32>
    %325 = vector.broadcast %322 : f32 to vector<8x128xf32>
    %326 = arith.mulf %324, %325 : vector<8x128xf32>
    %327 = arith.addf %321, %326 : vector<8x128xf32>
    %c14_167 = arith.constant 14 : index
    %328 = memref.load %arg1[%c14_167] : memref<16xf32, #tpu.memory_space<smem>>
    %c22_168 = arith.constant 22 : index
    %c0_169 = arith.constant 0 : index
    %c0_170 = arith.constant 0 : index
    %329 = vector.load %arg5[%c22_168, %c0_169, %c0_170] : memref<32x8x128xf32, #tpu.memory_space<vmem>>, vector<1x8x128xf32>
    %330 = vector.shape_cast %329 : vector<1x8x128xf32> to vector<8x128xf32>
    %331 = vector.broadcast %328 : f32 to vector<8x128xf32>
    %332 = arith.mulf %330, %331 : vector<8x128xf32>
    %333 = arith.addf %327, %332 : vector<8x128xf32>
    %c15_171 = arith.constant 15 : index
    %334 = memref.load %arg1[%c15_171] : memref<16xf32, #tpu.memory_space<smem>>
    %c23_172 = arith.constant 23 : index
    %c0_173 = arith.constant 0 : index
    %c0_174 = arith.constant 0 : index
    %335 = vector.load %arg5[%c23_172, %c0_173, %c0_174] : memref<32x8x128xf32, #tpu.memory_space<vmem>>, vector<1x8x128xf32>
    %336 = vector.shape_cast %335 : vector<1x8x128xf32> to vector<8x128xf32>
    %337 = vector.broadcast %334 : f32 to vector<8x128xf32>
    %338 = arith.mulf %336, %337 : vector<8x128xf32>
    %339 = arith.addf %333, %338 : vector<8x128xf32>
    %c1_175 = arith.constant 1 : index
    %340 = memref.load %arg2[%c1_175] : memref<2xf32, #tpu.memory_space<smem>>
    %341 = vector.broadcast %340 : f32 to vector<8x128xf32>
    %342 = arith.addf %339, %341 : vector<8x128xf32>
    %343 = math.tanh %342 : vector<8x128xf32>
    %c5_176 = arith.constant 5 : index
    %344 = memref.load %arg3[%c5_176] : memref<16xf32, #tpu.memory_space<smem>>
    %345 = vector.broadcast %344 : f32 to vector<8x128xf32>
    %346 = arith.mulf %343, %345 : vector<8x128xf32>
    %347 = arith.addf %288, %346 : vector<8x128xf32>
    %c13_177 = arith.constant 13 : index
    %348 = memref.load %arg3[%c13_177] : memref<16xf32, #tpu.memory_space<smem>>
    %349 = vector.broadcast %348 : f32 to vector<8x128xf32>
    %350 = arith.mulf %343, %349 : vector<8x128xf32>
    %351 = arith.addf %292, %350 : vector<8x128xf32>
    %c8_178 = arith.constant 8 : index
    %352 = memref.load %arg1[%c8_178] : memref<16xf32, #tpu.memory_space<smem>>
    %c8_179 = arith.constant 8 : index
    %c0_180 = arith.constant 0 : index
    %c0_181 = arith.constant 0 : index
    %353 = vector.load %arg5[%c8_179, %c0_180, %c0_181] : memref<32x8x128xf32, #tpu.memory_space<vmem>>, vector<1x8x128xf32>
    %354 = vector.shape_cast %353 : vector<1x8x128xf32> to vector<8x128xf32>
    %355 = vector.broadcast %352 : f32 to vector<8x128xf32>
    %356 = arith.mulf %354, %355 : vector<8x128xf32>
    %c9_182 = arith.constant 9 : index
    %357 = memref.load %arg1[%c9_182] : memref<16xf32, #tpu.memory_space<smem>>
    %c9_183 = arith.constant 9 : index
    %c0_184 = arith.constant 0 : index
    %c0_185 = arith.constant 0 : index
    %358 = vector.load %arg5[%c9_183, %c0_184, %c0_185] : memref<32x8x128xf32, #tpu.memory_space<vmem>>, vector<1x8x128xf32>
    %359 = vector.shape_cast %358 : vector<1x8x128xf32> to vector<8x128xf32>
    %360 = vector.broadcast %357 : f32 to vector<8x128xf32>
    %361 = arith.mulf %359, %360 : vector<8x128xf32>
    %362 = arith.addf %356, %361 : vector<8x128xf32>
    %c10_186 = arith.constant 10 : index
    %363 = memref.load %arg1[%c10_186] : memref<16xf32, #tpu.memory_space<smem>>
    %c12_187 = arith.constant 12 : index
    %c0_188 = arith.constant 0 : index
    %c0_189 = arith.constant 0 : index
    %364 = vector.load %arg5[%c12_187, %c0_188, %c0_189] : memref<32x8x128xf32, #tpu.memory_space<vmem>>, vector<1x8x128xf32>
    %365 = vector.shape_cast %364 : vector<1x8x128xf32> to vector<8x128xf32>
    %366 = vector.broadcast %363 : f32 to vector<8x128xf32>
    %367 = arith.mulf %365, %366 : vector<8x128xf32>
    %368 = arith.addf %362, %367 : vector<8x128xf32>
    %c11_190 = arith.constant 11 : index
    %369 = memref.load %arg1[%c11_190] : memref<16xf32, #tpu.memory_space<smem>>
    %c13_191 = arith.constant 13 : index
    %c0_192 = arith.constant 0 : index
    %c0_193 = arith.constant 0 : index
    %370 = vector.load %arg5[%c13_191, %c0_192, %c0_193] : memref<32x8x128xf32, #tpu.memory_space<vmem>>, vector<1x8x128xf32>
    %371 = vector.shape_cast %370 : vector<1x8x128xf32> to vector<8x128xf32>
    %372 = vector.broadcast %369 : f32 to vector<8x128xf32>
    %373 = arith.mulf %371, %372 : vector<8x128xf32>
    %374 = arith.addf %368, %373 : vector<8x128xf32>
    %c12_194 = arith.constant 12 : index
    %375 = memref.load %arg1[%c12_194] : memref<16xf32, #tpu.memory_space<smem>>
    %c24_195 = arith.constant 24 : index
    %c0_196 = arith.constant 0 : index
    %c0_197 = arith.constant 0 : index
    %376 = vector.load %arg5[%c24_195, %c0_196, %c0_197] : memref<32x8x128xf32, #tpu.memory_space<vmem>>, vector<1x8x128xf32>
    %377 = vector.shape_cast %376 : vector<1x8x128xf32> to vector<8x128xf32>
    %378 = vector.broadcast %375 : f32 to vector<8x128xf32>
    %379 = arith.mulf %377, %378 : vector<8x128xf32>
    %380 = arith.addf %374, %379 : vector<8x128xf32>
    %c13_198 = arith.constant 13 : index
    %381 = memref.load %arg1[%c13_198] : memref<16xf32, #tpu.memory_space<smem>>
    %c25_199 = arith.constant 25 : index
    %c0_200 = arith.constant 0 : index
    %c0_201 = arith.constant 0 : index
    %382 = vector.load %arg5[%c25_199, %c0_200, %c0_201] : memref<32x8x128xf32, #tpu.memory_space<vmem>>, vector<1x8x128xf32>
    %383 = vector.shape_cast %382 : vector<1x8x128xf32> to vector<8x128xf32>
    %384 = vector.broadcast %381 : f32 to vector<8x128xf32>
    %385 = arith.mulf %383, %384 : vector<8x128xf32>
    %386 = arith.addf %380, %385 : vector<8x128xf32>
    %c14_202 = arith.constant 14 : index
    %387 = memref.load %arg1[%c14_202] : memref<16xf32, #tpu.memory_space<smem>>
    %c28_203 = arith.constant 28 : index
    %c0_204 = arith.constant 0 : index
    %c0_205 = arith.constant 0 : index
    %388 = vector.load %arg5[%c28_203, %c0_204, %c0_205] : memref<32x8x128xf32, #tpu.memory_space<vmem>>, vector<1x8x128xf32>
    %389 = vector.shape_cast %388 : vector<1x8x128xf32> to vector<8x128xf32>
    %390 = vector.broadcast %387 : f32 to vector<8x128xf32>
    %391 = arith.mulf %389, %390 : vector<8x128xf32>
    %392 = arith.addf %386, %391 : vector<8x128xf32>
    %c15_206 = arith.constant 15 : index
    %393 = memref.load %arg1[%c15_206] : memref<16xf32, #tpu.memory_space<smem>>
    %c29_207 = arith.constant 29 : index
    %c0_208 = arith.constant 0 : index
    %c0_209 = arith.constant 0 : index
    %394 = vector.load %arg5[%c29_207, %c0_208, %c0_209] : memref<32x8x128xf32, #tpu.memory_space<vmem>>, vector<1x8x128xf32>
    %395 = vector.shape_cast %394 : vector<1x8x128xf32> to vector<8x128xf32>
    %396 = vector.broadcast %393 : f32 to vector<8x128xf32>
    %397 = arith.mulf %395, %396 : vector<8x128xf32>
    %398 = arith.addf %392, %397 : vector<8x128xf32>
    %c1_210 = arith.constant 1 : index
    %399 = memref.load %arg2[%c1_210] : memref<2xf32, #tpu.memory_space<smem>>
    %400 = vector.broadcast %399 : f32 to vector<8x128xf32>
    %401 = arith.addf %398, %400 : vector<8x128xf32>
    %402 = math.tanh %401 : vector<8x128xf32>
    %c6_211 = arith.constant 6 : index
    %403 = memref.load %arg3[%c6_211] : memref<16xf32, #tpu.memory_space<smem>>
    %404 = vector.broadcast %403 : f32 to vector<8x128xf32>
    %405 = arith.mulf %402, %404 : vector<8x128xf32>
    %406 = arith.addf %347, %405 : vector<8x128xf32>
    %c14_212 = arith.constant 14 : index
    %407 = memref.load %arg3[%c14_212] : memref<16xf32, #tpu.memory_space<smem>>
    %408 = vector.broadcast %407 : f32 to vector<8x128xf32>
    %409 = arith.mulf %402, %408 : vector<8x128xf32>
    %410 = arith.addf %351, %409 : vector<8x128xf32>
    %c8_213 = arith.constant 8 : index
    %411 = memref.load %arg1[%c8_213] : memref<16xf32, #tpu.memory_space<smem>>
    %c10_214 = arith.constant 10 : index
    %c0_215 = arith.constant 0 : index
    %c0_216 = arith.constant 0 : index
    %412 = vector.load %arg5[%c10_214, %c0_215, %c0_216] : memref<32x8x128xf32, #tpu.memory_space<vmem>>, vector<1x8x128xf32>
    %413 = vector.shape_cast %412 : vector<1x8x128xf32> to vector<8x128xf32>
    %414 = vector.broadcast %411 : f32 to vector<8x128xf32>
    %415 = arith.mulf %413, %414 : vector<8x128xf32>
    %c9_217 = arith.constant 9 : index
    %416 = memref.load %arg1[%c9_217] : memref<16xf32, #tpu.memory_space<smem>>
    %c11_218 = arith.constant 11 : index
    %c0_219 = arith.constant 0 : index
    %c0_220 = arith.constant 0 : index
    %417 = vector.load %arg5[%c11_218, %c0_219, %c0_220] : memref<32x8x128xf32, #tpu.memory_space<vmem>>, vector<1x8x128xf32>
    %418 = vector.shape_cast %417 : vector<1x8x128xf32> to vector<8x128xf32>
    %419 = vector.broadcast %416 : f32 to vector<8x128xf32>
    %420 = arith.mulf %418, %419 : vector<8x128xf32>
    %421 = arith.addf %415, %420 : vector<8x128xf32>
    %c10_221 = arith.constant 10 : index
    %422 = memref.load %arg1[%c10_221] : memref<16xf32, #tpu.memory_space<smem>>
    %c14_222 = arith.constant 14 : index
    %c0_223 = arith.constant 0 : index
    %c0_224 = arith.constant 0 : index
    %423 = vector.load %arg5[%c14_222, %c0_223, %c0_224] : memref<32x8x128xf32, #tpu.memory_space<vmem>>, vector<1x8x128xf32>
    %424 = vector.shape_cast %423 : vector<1x8x128xf32> to vector<8x128xf32>
    %425 = vector.broadcast %422 : f32 to vector<8x128xf32>
    %426 = arith.mulf %424, %425 : vector<8x128xf32>
    %427 = arith.addf %421, %426 : vector<8x128xf32>
    %c11_225 = arith.constant 11 : index
    %428 = memref.load %arg1[%c11_225] : memref<16xf32, #tpu.memory_space<smem>>
    %c15_226 = arith.constant 15 : index
    %c0_227 = arith.constant 0 : index
    %c0_228 = arith.constant 0 : index
    %429 = vector.load %arg5[%c15_226, %c0_227, %c0_228] : memref<32x8x128xf32, #tpu.memory_space<vmem>>, vector<1x8x128xf32>
    %430 = vector.shape_cast %429 : vector<1x8x128xf32> to vector<8x128xf32>
    %431 = vector.broadcast %428 : f32 to vector<8x128xf32>
    %432 = arith.mulf %430, %431 : vector<8x128xf32>
    %433 = arith.addf %427, %432 : vector<8x128xf32>
    %c12_229 = arith.constant 12 : index
    %434 = memref.load %arg1[%c12_229] : memref<16xf32, #tpu.memory_space<smem>>
    %c26_230 = arith.constant 26 : index
    %c0_231 = arith.constant 0 : index
    %c0_232 = arith.constant 0 : index
    %435 = vector.load %arg5[%c26_230, %c0_231, %c0_232] : memref<32x8x128xf32, #tpu.memory_space<vmem>>, vector<1x8x128xf32>
    %436 = vector.shape_cast %435 : vector<1x8x128xf32> to vector<8x128xf32>
    %437 = vector.broadcast %434 : f32 to vector<8x128xf32>
    %438 = arith.mulf %436, %437 : vector<8x128xf32>
    %439 = arith.addf %433, %438 : vector<8x128xf32>
    %c13_233 = arith.constant 13 : index
    %440 = memref.load %arg1[%c13_233] : memref<16xf32, #tpu.memory_space<smem>>
    %c27_234 = arith.constant 27 : index
    %c0_235 = arith.constant 0 : index
    %c0_236 = arith.constant 0 : index
    %441 = vector.load %arg5[%c27_234, %c0_235, %c0_236] : memref<32x8x128xf32, #tpu.memory_space<vmem>>, vector<1x8x128xf32>
    %442 = vector.shape_cast %441 : vector<1x8x128xf32> to vector<8x128xf32>
    %443 = vector.broadcast %440 : f32 to vector<8x128xf32>
    %444 = arith.mulf %442, %443 : vector<8x128xf32>
    %445 = arith.addf %439, %444 : vector<8x128xf32>
    %c14_237 = arith.constant 14 : index
    %446 = memref.load %arg1[%c14_237] : memref<16xf32, #tpu.memory_space<smem>>
    %c30_238 = arith.constant 30 : index
    %c0_239 = arith.constant 0 : index
    %c0_240 = arith.constant 0 : index
    %447 = vector.load %arg5[%c30_238, %c0_239, %c0_240] : memref<32x8x128xf32, #tpu.memory_space<vmem>>, vector<1x8x128xf32>
    %448 = vector.shape_cast %447 : vector<1x8x128xf32> to vector<8x128xf32>
    %449 = vector.broadcast %446 : f32 to vector<8x128xf32>
    %450 = arith.mulf %448, %449 : vector<8x128xf32>
    %451 = arith.addf %445, %450 : vector<8x128xf32>
    %c15_241 = arith.constant 15 : index
    %452 = memref.load %arg1[%c15_241] : memref<16xf32, #tpu.memory_space<smem>>
    %c31_242 = arith.constant 31 : index
    %c0_243 = arith.constant 0 : index
    %c0_244 = arith.constant 0 : index
    %453 = vector.load %arg5[%c31_242, %c0_243, %c0_244] : memref<32x8x128xf32, #tpu.memory_space<vmem>>, vector<1x8x128xf32>
    %454 = vector.shape_cast %453 : vector<1x8x128xf32> to vector<8x128xf32>
    %455 = vector.broadcast %452 : f32 to vector<8x128xf32>
    %456 = arith.mulf %454, %455 : vector<8x128xf32>
    %457 = arith.addf %451, %456 : vector<8x128xf32>
    %c1_245 = arith.constant 1 : index
    %458 = memref.load %arg2[%c1_245] : memref<2xf32, #tpu.memory_space<smem>>
    %459 = vector.broadcast %458 : f32 to vector<8x128xf32>
    %460 = arith.addf %457, %459 : vector<8x128xf32>
    %461 = math.tanh %460 : vector<8x128xf32>
    %c7_246 = arith.constant 7 : index
    %462 = memref.load %arg3[%c7_246] : memref<16xf32, #tpu.memory_space<smem>>
    %463 = vector.broadcast %462 : f32 to vector<8x128xf32>
    %464 = arith.mulf %461, %463 : vector<8x128xf32>
    %465 = arith.addf %406, %464 : vector<8x128xf32>
    %c15_247 = arith.constant 15 : index
    %466 = memref.load %arg3[%c15_247] : memref<16xf32, #tpu.memory_space<smem>>
    %467 = vector.broadcast %466 : f32 to vector<8x128xf32>
    %468 = arith.mulf %461, %467 : vector<8x128xf32>
    %469 = arith.addf %410, %468 : vector<8x128xf32>
    %c0_248 = arith.constant 0 : index
    %470 = memref.load %arg4[%c0_248] : memref<2xf32, #tpu.memory_space<smem>>
    %471 = vector.broadcast %470 : f32 to vector<8x128xf32>
    %472 = arith.addf %465, %471 : vector<8x128xf32>
    %c0_249 = arith.constant 0 : index
    %c0_250 = arith.constant 0 : index
    %c0_251 = arith.constant 0 : index
    %473 = vector.load %arg6[%c0_249, %c0_250, %c0_251] : memref<2x8x128xf32, #tpu.memory_space<vmem>>, vector<1x8x128xf32>
    %474 = vector.shape_cast %473 : vector<1x8x128xf32> to vector<8x128xf32>
    %475 = vector.shape_cast %472 : vector<8x128xf32> to vector<1x8x128xf32>
    tpu.vector_store %arg6[%c0_249, %c0_250, %c0_251], %475 {strides = array<i32>} : memref<2x8x128xf32, #tpu.memory_space<vmem>>, vector<1x8x128xf32>,
    %c1_252 = arith.constant 1 : index
    %476 = memref.load %arg4[%c1_252] : memref<2xf32, #tpu.memory_space<smem>>
    %477 = vector.broadcast %476 : f32 to vector<8x128xf32>
    %478 = arith.addf %469, %477 : vector<8x128xf32>
    %c1_253 = arith.constant 1 : index
    %c0_254 = arith.constant 0 : index
    %c0_255 = arith.constant 0 : index
    %479 = vector.load %arg6[%c1_253, %c0_254, %c0_255] : memref<2x8x128xf32, #tpu.memory_space<vmem>>, vector<1x8x128xf32>
    %480 = vector.shape_cast %479 : vector<1x8x128xf32> to vector<8x128xf32>
    %481 = vector.shape_cast %478 : vector<8x128xf32> to vector<1x8x128xf32>
    tpu.vector_store %arg6[%c1_253, %c0_254, %c0_255], %481 {strides = array<i32>} : memref<2x8x128xf32, #tpu.memory_space<vmem>>, vector<1x8x128xf32>,
    return
  }
  func.func @transform_0(%arg0: i32) -> i32 {
    %c0_i32 = arith.constant 0 : i32
    %c0_i32_0 = arith.constant 0 : i32
    return %c0_i32 : i32
  }
  func.func @transform_1(%arg0: i32) -> i32 {
    %c0_i32 = arith.constant 0 : i32
    %c0_i32_0 = arith.constant 0 : i32
    return %c0_i32 : i32
  }
  func.func @transform_2(%arg0: i32) -> i32 {
    %c0_i32 = arith.constant 0 : i32
    %c0_i32_0 = arith.constant 0 : i32
    return %c0_i32 : i32
  }
  func.func @transform_3(%arg0: i32) -> i32 {
    %c0_i32 = arith.constant 0 : i32
    %c0_i32_0 = arith.constant 0 : i32
    return %c0_i32 : i32
  }
  func.func @transform_4(%arg0: i32) -> (i32, i32, i32) {
    %c0_i32 = arith.constant 0 : i32
    %c0_i32_0 = arith.constant 0 : i32
    %c0_i32_1 = arith.constant 0 : i32
    return %c0_i32, %arg0, %c0_i32_0 : i32, i32, i32
  }
  func.func @transform_5(%arg0: i32) -> (i32, i32, i32) {
    %c0_i32 = arith.constant 0 : i32
    %c0_i32_0 = arith.constant 0 : i32
    %c0_i32_1 = arith.constant 0 : i32
    return %c0_i32, %arg0, %c0_i32_0 : i32, i32, i32
  }
}

</mosaic_0001>

<llo_original>
// kernel: model_tanh_forward.1
$region0: #{model_tanh_forward.1}
  #allocation0 [shape = 'u32[]', space=smem, size = 0x4, offset = 0x4, fixed_abs, tag = 'smem constant byte address 0x4 - core index']
  #allocation1 [shape = 'u32[72,128]{1,0:T(1,128)}', space=vmem, size = 0x9000, scoped, tag = 'internal scratch']
  %s0 = inlined_call_operand.vmem [shape: f32[16], index: 0, kind: input, shape index: {}]
  %s1 = inlined_call_operand.vmem [shape: f32[2], index: 1, kind: input, shape index: {}]
  %s2 = inlined_call_operand.vmem [shape: f32[16], index: 2, kind: input, shape index: {}]
  %s3 = inlined_call_operand.vmem [shape: f32[2], index: 3, kind: input, shape index: {}]
  %s4 = inlined_call_operand.vmem [shape: f32[32,8,128], index: 4, kind: input, shape index: {}]
  %s5 = inlined_call_operand.vmem [shape: f32[2,8,128], index: 5, kind: output, shape index: {}]
  %s6 = sld [smem:[#allocation0]]
  $region46: #{model_tanh_forward.1} parent=0
    _
  %s8 = ssub.s32 1, %s6
  %s9 = scalar_select 0, %s8, %s6
  $region1: #{model_tanh_forward.1} parent=0
    #allocation2 [shape = 'u8[512]{0}', space=smem, size = 0x200, scoped, tag = 'input window, operand 0, single buffered']
    #allocation3 [shape = 's32[1]{0}', space=sflag, size = 0x4, scoped, tag = 'scoped memory for model_tanh_forward.1']
    #allocation4 [shape = 'u8[512]{0}', space=smem, size = 0x200, scoped, tag = 'input window, operand 1, single buffered']
    #allocation5 [shape = 's32[1]{0}', space=sflag, size = 0x4, scoped, tag = 'scoped memory for model_tanh_forward.1']
    #allocation6 [shape = 'u8[512]{0}', space=smem, size = 0x200, scoped, tag = 'input window, operand 2, single buffered']
    #allocation7 [shape = 'u8[512]{0}', space=smem, size = 0x200, scoped, tag = 'input window, operand 3, single buffered']
    #allocation8 [shape = 's32[1]{0}', space=sflag, size = 0x4, scoped, tag = 'scoped memory for model_tanh_forward.1']
    %10 = vsyncpa [#allocation3], 0
    %11 = vsyncpa [#allocation5], 0
    %12 = vsyncpa [#allocation8], 0
    // Predicated region
    $region2: #{model_tanh_forward.1} parent=1 // pred_check
      _
    $region3: #{model_tanh_forward.1} parent=1 // pred_check_branch
      %14 = sbr.rel (0) target = $region5
    $region4: #{model_tanh_forward.1} parent=1 // pred_region
      %16 = vsyncadd [#allocation3], 0
      %s18 = sshll.u32 %s0, 4
      %s19 = int_to_ptr.vmem [resolvable:$true] %s18
      %21 = dma.vmem_to_smem %s19, 16, [#allocation2], [#allocation3]
    $region5: #{model_tanh_forward.1} parent=1 // pred_fallthru
      _
    // Predicated region
    $region6: #{model_tanh_forward.1} parent=1 // pred_check
      _
    $region7: #{model_tanh_forward.1} parent=1 // pred_check_branch
      %23 = sbr.rel (0) target = $region9
    $region8: #{model_tanh_forward.1} parent=1 // pred_region
      %25 = vsyncadd [#allocation5], 0
      %s27 = sshll.u32 %s1, 4
      %s28 = int_to_ptr.vmem [resolvable:$true] %s27
      %30 = dma.vmem_to_smem %s28, 16, [#allocation4], [#allocation5]
    $region9: #{model_tanh_forward.1} parent=1 // pred_fallthru
      _
    // Predicated region
    $region10: #{model_tanh_forward.1} parent=1 // pred_check
      _
    $region11: #{model_tanh_forward.1} parent=1 // pred_check_branch
      %32 = sbr.rel (0) target = $region13
    $region12: #{model_tanh_forward.1} parent=1 // pred_region
      %34 = vsyncadd [#allocation5], 0
      %s36 = sshll.u32 %s2, 4
      %s37 = int_to_ptr.vmem [resolvable:$true] %s36
      %39 = dma.vmem_to_smem %s37, 16, [#allocation6], [#allocation5]
    $region13: #{model_tanh_forward.1} parent=1 // pred_fallthru
      _
    // Predicated region
    $region14: #{model_tanh_forward.1} parent=1 // pred_check
      _
    $region15: #{model_tanh_forward.1} parent=1 // pred_check_branch
      %41 = sbr.rel (0) target = $region17
    $region16: #{model_tanh_forward.1} parent=1 // pred_region
      %43 = vsyncadd [#allocation8], 0
      %s45 = sshll.u32 %s3, 4
      %s46 = int_to_ptr.vmem [resolvable:$true] %s45
      %48 = dma.vmem_to_smem %s46, 16, [#allocation7], [#allocation8]
    $region17: #{model_tanh_forward.1} parent=1 // pred_fallthru
      _
    // Predicated region
    $region18: #{model_tanh_forward.1} parent=1 // pred_check
      _
    $region19: #{model_tanh_forward.1} parent=1 // pred_check_branch
      %50 = sbr.rel (0) target = $region21
    $region20: #{model_tanh_forward.1} parent=1 // pred_region
      _
    $region21: #{model_tanh_forward.1} parent=1 // pred_fallthru
      _
    // Predicated region
    $region22: #{model_tanh_forward.1} parent=1 // pred_check
      _
    $region23: #{model_tanh_forward.1} parent=1 // pred_check_branch
      %52 = sbr.rel (0) target = $region25
    $region24: #{model_tanh_forward.1} parent=1 // pred_region
      %54 = dma.done [#allocation3], 16
    $region25: #{model_tanh_forward.1} parent=1 // pred_fallthru
      _
    // Predicated region
    $region26: #{model_tanh_forward.1} parent=1 // pred_check
      _
    $region27: #{model_tanh_forward.1} parent=1 // pred_check_branch
      %56 = sbr.rel (0) target = $region29
    $region28: #{model_tanh_forward.1} parent=1 // pred_region
      %58 = dma.done [#allocation5], 16
    $region29: #{model_tanh_forward.1} parent=1 // pred_fallthru
      _
    // Predicated region
    $region30: #{model_tanh_forward.1} parent=1 // pred_check
      _
    $region31: #{model_tanh_forward.1} parent=1 // pred_check_branch
      %60 = sbr.rel (0) target = $region33
    $region32: #{model_tanh_forward.1} parent=1 // pred_region
      %62 = dma.done [#allocation5], 16
    $region33: #{model_tanh_forward.1} parent=1 // pred_fallthru
      _
    // Predicated region
    $region34: #{model_tanh_forward.1} parent=1 // pred_check
      _
    $region35: #{model_tanh_forward.1} parent=1 // pred_check_branch
      %64 = sbr.rel (0) target = $region37
    $region36: #{model_tanh_forward.1} parent=1 // pred_region
      %66 = dma.done [#allocation8], 16
    $region37: #{model_tanh_forward.1} parent=1 // pred_fallthru
      _
    %67 = sfence
    %s68 = sld [smem:[#allocation2]]
    %v69 = vld [vmem:[%s4] sm:$0xff]
    %v70 = vstv %s68
    %v71 = vmul.f32 %v69, %v70
    %s72 = sld [smem:[#allocation2 + $0x1]]
    %s73 = scalar_lea.vmem %s4, 8
    %v74 = vld [vmem:[%s73] sm:$0xff]
    %v75 = vstv %s72
    %v76 = vmul.f32 %v74, %v75
    %v77 = vadd.f32 %v71, %v76
    %s78 = sld [smem:[#allocation2 + $0x2]]
    %s79 = scalar_lea.vmem %s4, 32
    %v80 = vld [vmem:[%s79] sm:$0xff]
    %v81 = vstv %s78
    %v82 = vmul.f32 %v80, %v81
    %v83 = vadd.f32 %v77, %v82
    %s84 = sld [smem:[#allocation2 + $0x3]]
    %s85 = scalar_lea.vmem %s4, 40
    %v86 = vld [vmem:[%s85] sm:$0xff]
    %v87 = vstv %s84
    %v88 = vmul.f32 %v86, %v87
    %v89 = vadd.f32 %v83, %v88
    %s90 = sld [smem:[#allocation2 + $0x4]]
    %s91 = scalar_lea.vmem %s4, 128
    %v92 = vld [vmem:[%s91] sm:$0xff]
    %v93 = vstv %s90
    %v94 = vmul.f32 %v92, %v93
    %v95 = vadd.f32 %v89, %v94
    %s96 = sld [smem:[#allocation2 + $0x5]]
    %s97 = scalar_lea.vmem %s4, 136
    %v98 = vld [vmem:[%s97] sm:$0xff]
    %v99 = vstv %s96
    %v100 = vmul.f32 %v98, %v99
    %v101 = vadd.f32 %v95, %v100
    %s102 = sld [smem:[#allocation2 + $0x6]]
    %s103 = scalar_lea.vmem %s4, 160
    %v104 = vld [vmem:[%s103] sm:$0xff]
    %v105 = vstv %s102
    %v106 = vmul.f32 %v104, %v105
    %v107 = vadd.f32 %v101, %v106
    %s108 = sld [smem:[#allocation2 + $0x7]]
    %s109 = scalar_lea.vmem %s4, 168
    %v110 = vld [vmem:[%s109] sm:$0xff]
    %v111 = vstv %s108
    %v112 = vmul.f32 %v110, %v111
    %v113 = vadd.f32 %v107, %v112
    %s114 = sld [smem:[#allocation4]]
    %v115 = vstv %s114
    %v116 = vadd.f32 %v113, %v115
    %v117 = vtanh.pop %v116
    %s118 = sld [smem:[#allocation6]]
    %v119 = vstv %s118
    %v120 = vmul.f32 %v117, %v119
    %s121 = sld [smem:[#allocation6 + $0x8]]
    %v122 = vstv %s121
    %v123 = vmul.f32 %v117, %v122
    %s124 = scalar_lea.vmem %s4, 16
    %v125 = vld [vmem:[%s124] sm:$0xff]
    %v126 = vmul.f32 %v125, %v70
    %s127 = scalar_lea.vmem %s4, 24
    %v128 = vld [vmem:[%s127] sm:$0xff]
    %v129 = vmul.f32 %v128, %v75
    %v130 = vadd.f32 %v126, %v129
    %s131 = scalar_lea.vmem %s4, 48
    %v132 = vld [vmem:[%s131] sm:$0xff]
    %v133 = vmul.f32 %v132, %v81
    %v134 = vadd.f32 %v130, %v133
    %s135 = scalar_lea.vmem %s4, 56
    %v136 = vld [vmem:[%s135] sm:$0xff]
    %v137 = vmul.f32 %v136, %v87
    %v138 = vadd.f32 %v134, %v137
    %s139 = scalar_lea.vmem %s4, 144
    %v140 = vld [vmem:[%s139] sm:$0xff]
    %v141 = vmul.f32 %v140, %v93
    %v142 = vadd.f32 %v138, %v141
    %s143 = scalar_lea.vmem %s4, 152
    %v144 = vld [vmem:[%s143] sm:$0xff]
    %v145 = vmul.f32 %v144, %v99
    %v146 = vadd.f32 %v142, %v145
    %s147 = scalar_lea.vmem %s4, 176
    %v148 = vld [vmem:[%s147] sm:$0xff]
    %v149 = vmul.f32 %v148, %v105
    %v150 = vadd.f32 %v146, %v149
    %s151 = scalar_lea.vmem %s4, 184
    %v152 = vld [vmem:[%s151] sm:$0xff]
    %v153 = vmul.f32 %v152, %v111
    %v154 = vadd.f32 %v150, %v153
    %v155 = vadd.f32 %v154, %v115
    %v156 = vtanh.pop %v155
    %s157 = sld [smem:[#allocation6 + $0x1]]
    %v158 = vstv %s157
    %v159 = vmul.f32 %v156, %v158
    %v160 = vadd.f32 %v120, %v159
    %s161 = sld [smem:[#allocation6 + $0x9]]
    %v162 = vstv %s161
    %v163 = vmul.f32 %v156, %v162
    %v164 = vadd.f32 %v123, %v163
    %s165 = scalar_lea.vmem %s4, 64
    %v166 = vld [vmem:[%s165] sm:$0xff]
    %v167 = vmul.f32 %v166, %v70
    %s168 = scalar_lea.vmem %s4, 72
    %v169 = vld [vmem:[%s168] sm:$0xff]
    %v170 = vmul.f32 %v169, %v75
    %v171 = vadd.f32 %v167, %v170
    %s172 = scalar_lea.vmem %s4, 96
    %v173 = vld [vmem:[%s172] sm:$0xff]
    %v174 = vmul.f32 %v173, %v81
    %v175 = vadd.f32 %v171, %v174
    %s176 = scalar_lea.vmem %s4, 104
    %v177 = vld [vmem:[%s176] sm:$0xff]
    %v178 = vmul.f32 %v177, %v87
    %v179 = vadd.f32 %v175, %v178
    %s180 = scalar_lea.vmem %s4, 192
    %v181 = vld [vmem:[%s180] sm:$0xff]
    %v182 = vmul.f32 %v181, %v93
    %v183 = vadd.f32 %v179, %v182
    %s184 = scalar_lea.vmem %s4, 200
    %v185 = vld [vmem:[%s184] sm:$0xff]
    %v186 = vmul.f32 %v185, %v99
    %v187 = vadd.f32 %v183, %v186
    %s188 = scalar_lea.vmem %s4, 224
    %v189 = vld [vmem:[%s188] sm:$0xff]
    %v190 = vmul.f32 %v189, %v105
    %v191 = vadd.f32 %v187, %v190
    %s192 = scalar_lea.vmem %s4, 232
    %v193 = vld [vmem:[%s192] sm:$0xff]
    %v194 = vmul.f32 %v193, %v111
    %v195 = vadd.f32 %v191, %v194
    %v196 = vadd.f32 %v195, %v115
    %v197 = vtanh.pop %v196
    %s198 = sld [smem:[#allocation6 + $0x2]]
    %v199 = vstv %s198
    %v200 = vmul.f32 %v197, %v199
    %v201 = vadd.f32 %v160, %v200
    %s202 = sld [smem:[#allocation6 + $0xa]]
    %v203 = vstv %s202
    %v204 = vmul.f32 %v197, %v203
    %v205 = vadd.f32 %v164, %v204
    %s206 = scalar_lea.vmem %s4, 80
    %v207 = vld [vmem:[%s206] sm:$0xff]
    %v208 = vmul.f32 %v207, %v70
    %s209 = scalar_lea.vmem %s4, 88
    %v210 = vld [vmem:[%s209] sm:$0xff]
    %v211 = vmul.f32 %v210, %v75
    %v212 = vadd.f32 %v208, %v211
    %s213 = scalar_lea.vmem %s4, 112
    %v214 = vld [vmem:[%s213] sm:$0xff]
    %v215 = vmul.f32 %v214, %v81
    %v216 = vadd.f32 %v212, %v215
    %s217 = scalar_lea.vmem %s4, 120
    %v218 = vld [vmem:[%s217] sm:$0xff]
    %v219 = vmul.f32 %v218, %v87
    %v220 = vadd.f32 %v216, %v219
    %s221 = scalar_lea.vmem %s4, 208
    %v222 = vld [vmem:[%s221] sm:$0xff]
    %v223 = vmul.f32 %v222, %v93
    %v224 = vadd.f32 %v220, %v223
    %s225 = scalar_lea.vmem %s4, 216
    %v226 = vld [vmem:[%s225] sm:$0xff]
    %v227 = vmul.f32 %v226, %v99
    %v228 = vadd.f32 %v224, %v227
    %s229 = scalar_lea.vmem %s4, 240
    %v230 = vld [vmem:[%s229] sm:$0xff]
    %v231 = vmul.f32 %v230, %v105
    %v232 = vadd.f32 %v228, %v231
    %s233 = scalar_lea.vmem %s4, 248
    %v234 = vld [vmem:[%s233] sm:$0xff]
    %v235 = vmul.f32 %v234, %v111
    %v236 = vadd.f32 %v232, %v235
    %v237 = vadd.f32 %v236, %v115
    %v238 = vtanh.pop %v237
    %s239 = sld [smem:[#allocation6 + $0x3]]
    %v240 = vstv %s239
    %v241 = vmul.f32 %v238, %v240
    %v242 = vadd.f32 %v201, %v241
    %s243 = sld [smem:[#allocation6 + $0xb]]
    %v244 = vstv %s243
    %v245 = vmul.f32 %v238, %v244
    %v246 = vadd.f32 %v205, %v245
    %s247 = sld [smem:[#allocation2 + $0x8]]
    %v248 = vstv %s247
    %v249 = vmul.f32 %v69, %v248
    %s250 = sld [smem:[#allocation2 + $0x9]]
    %v251 = vstv %s250
    %v252 = vmul.f32 %v74, %v251
    %v253 = vadd.f32 %v249, %v252
    %s254 = sld [smem:[#allocation2 + $0xa]]
    %v255 = vstv %s254
    %v256 = vmul.f32 %v80, %v255
    %v257 = vadd.f32 %v253, %v256
    %s258 = sld [smem:[#allocation2 + $0xb]]
    %v259 = vstv %s258
    %v260 = vmul.f32 %v86, %v259
    %v261 = vadd.f32 %v257, %v260
    %s262 = sld [smem:[#allocation2 + $0xc]]
    %v263 = vstv %s262
    %v264 = vmul.f32 %v92, %v263
    %v265 = vadd.f32 %v261, %v264
    %s266 = sld [smem:[#allocation2 + $0xd]]
    %v267 = vstv %s266
    %v268 = vmul.f32 %v98, %v267
    %v269 = vadd.f32 %v265, %v268
    %s270 = sld [smem:[#allocation2 + $0xe]]
    %v271 = vstv %s270
    %v272 = vmul.f32 %v104, %v271
    %v273 = vadd.f32 %v269, %v272
    %s274 = sld [smem:[#allocation2 + $0xf]]
    %v275 = vstv %s274
    %v276 = vmul.f32 %v110, %v275
    %v277 = vadd.f32 %v273, %v276
    %s278 = sld [smem:[#allocation4 + $0x1]]
    %v279 = vstv %s278
    %v280 = vadd.f32 %v277, %v279
    %v281 = vtanh.pop %v280
    %s282 = sld [smem:[#allocation6 + $0x4]]
    %v283 = vstv %s282
    %v284 = vmul.f32 %v281, %v283
    %v285 = vadd.f32 %v242, %v284
    %s286 = sld [smem:[#allocation6 + $0xc]]
    %v287 = vstv %s286
    %v288 = vmul.f32 %v281, %v287
    %v289 = vadd.f32 %v246, %v288
    %v290 = vmul.f32 %v125, %v248
    %v291 = vmul.f32 %v128, %v251
    %v292 = vadd.f32 %v290, %v291
    %v293 = vmul.f32 %v132, %v255
    %v294 = vadd.f32 %v292, %v293
    %v295 = vmul.f32 %v136, %v259
    %v296 = vadd.f32 %v294, %v295
    %v297 = vmul.f32 %v140, %v263
    %v298 = vadd.f32 %v296, %v297
    %v299 = vmul.f32 %v144, %v267
    %v300 = vadd.f32 %v298, %v299
    %v301 = vmul.f32 %v148, %v271
    %v302 = vadd.f32 %v300, %v301
    %v303 = vmul.f32 %v152, %v275
    %v304 = vadd.f32 %v302, %v303
    %v305 = vadd.f32 %v304, %v279
    %v306 = vtanh.pop %v305
    %s307 = sld [smem:[#allocation6 + $0x5]]
    %v308 = vstv %s307
    %v309 = vmul.f32 %v306, %v308
    %v310 = vadd.f32 %v285, %v309
    %s311 = sld [smem:[#allocation6 + $0xd]]
    %v312 = vstv %s311
    %v313 = vmul.f32 %v306, %v312
    %v314 = vadd.f32 %v289, %v313
    %v315 = vmul.f32 %v166, %v248
    %v316 = vmul.f32 %v169, %v251
    %v317 = vadd.f32 %v315, %v316
    %v318 = vmul.f32 %v173, %v255
    %v319 = vadd.f32 %v317, %v318
    %v320 = vmul.f32 %v177, %v259
    %v321 = vadd.f32 %v319, %v320
    %v322 = vmul.f32 %v181, %v263
    %v323 = vadd.f32 %v321, %v322
    %v324 = vmul.f32 %v185, %v267
    %v325 = vadd.f32 %v323, %v324
    %v326 = vmul.f32 %v189, %v271
    %v327 = vadd.f32 %v325, %v326
    %v328 = vmul.f32 %v193, %v275
    %v329 = vadd.f32 %v327, %v328
    %v330 = vadd.f32 %v329, %v279
    %v331 = vtanh.pop %v330
    %s332 = sld [smem:[#allocation6 + $0x6]]
    %v333 = vstv %s332
    %v334 = vmul.f32 %v331, %v333
    %v335 = vadd.f32 %v310, %v334
    %s336 = sld [smem:[#allocation6 + $0xe]]
    %v337 = vstv %s336
    %v338 = vmul.f32 %v331, %v337
    %v339 = vadd.f32 %v314, %v338
    %v340 = vmul.f32 %v207, %v248
    %v341 = vmul.f32 %v210, %v251
    %v342 = vadd.f32 %v340, %v341
    %v343 = vmul.f32 %v214, %v255
    %v344 = vadd.f32 %v342, %v343
    %v345 = vmul.f32 %v218, %v259
    %v346 = vadd.f32 %v344, %v345
    %v347 = vmul.f32 %v222, %v263
    %v348 = vadd.f32 %v346, %v347
    %v349 = vmul.f32 %v226, %v267
    %v350 = vadd.f32 %v348, %v349
    %v351 = vmul.f32 %v230, %v271
    %v352 = vadd.f32 %v350, %v351
    %v353 = vmul.f32 %v234, %v275
    %v354 = vadd.f32 %v352, %v353
    %v355 = vadd.f32 %v354, %v279
    %v356 = vtanh.pop %v355
    %s357 = sld [smem:[#allocation6 + $0x7]]
    %v358 = vstv %s357
    %v359 = vmul.f32 %v356, %v358
    %v360 = vadd.f32 %v335, %v359
    %s361 = sld [smem:[#allocation6 + $0xf]]
    %v362 = vstv %s361
    %v363 = vmul.f32 %v356, %v362
    %v364 = vadd.f32 %v339, %v363
    %s365 = sld [smem:[#allocation7]]
    %v366 = vstv %s365
    %v367 = vadd.f32 %v360, %v366
    %368 = vst [vmem:[%s5] sm:$0xff] %v367
    %s369 = sld [smem:[#allocation7 + $0x1]]
    %v370 = vstv %s369
    %v371 = vadd.f32 %v364, %v370
    %s372 = scalar_lea.vmem %s5, 8
    %373 = vst [vmem:[%s372] sm:$0xff] %v371
    // Predicated region
    $region38: #{model_tanh_forward.1} parent=1 // pred_check
      _
    $region39: #{model_tanh_forward.1} parent=1 // pred_check_branch
      %375 = sbr.rel (0) target = $region41
    $region40: #{model_tanh_forward.1} parent=1 // pred_region
      _
    $region41: #{model_tanh_forward.1} parent=1 // pred_fallthru
      _
    // Predicated region
    $region42: #{model_tanh_forward.1} parent=1 // pred_check
      _
    $region43: #{model_tanh_forward.1} parent=1 // pred_check_branch
      %377 = sbr.rel (0) target = $region45
    $region44: #{model_tanh_forward.1} parent=1 // pred_region
      _
    $region45: #{model_tanh_forward.1} parent=1 // pred_fallthru
      _
    %378 = vsyncpa [#allocation3], 1
    %379 = vsyncpa [#allocation5], 1
    %380 = vsyncpa [#allocation8], 1

</llo_original>
